<compile_context>
chip_gen: v7x
topology: tpu7x:2x2x1
jax: 0.10.0
libtpu: 0.0.40
codegen_flags: <defaults>
</compile_context>

<pallas_src>
import functools

import jax
import jax.numpy as jnp
from jax.experimental import pallas as pl
from jax.experimental.pallas import tpu as pltpu


# --------------------------- kernels ---------------------------------------
def _copy_kernel(x_ref, o_ref):
    # x_ref: (1, 1, cpg, THW) VMEM block, o_ref: (1, cpg, THW) VMEM block.
    # Pure lane-dense copy; the channel shuffle itself is realized by the
    # output BlockSpec placement (write-back DMA addressing).
    o_ref[...] = x_ref[...].reshape(o_ref.shape)


def _make_permute_kernel(C, groups):
    # Fallback: vectorized in-VMEM channel permutation over a full (C, HW)
    # block (one load, one XLU sublane permute, one unmasked store).
    cpg = C // groups

    def kernel(x_ref, o_ref):
        x = x_ref[...]                       # (1, C, HW)
        hw = x.shape[-1]
        y = x.reshape(groups, cpg, hw)
        y = jnp.swapaxes(y, 0, 1)            # (cpg, groups, hw): the shuffle
        o_ref[...] = y.reshape(1, C, hw)

    return kernel


# --------------------------- tiling helper ----------------------------------
def _pick_thw(HW, cpg, itemsize):
    """Lane-tile length: multiple of 128 that divides HW, VMEM-budgeted."""
    # 2 arrays (in+out) x 2 pipeline buffers x cpg x THW x itemsize <= budget.
    budget = 8 * 1024 * 1024  # conservative: fits v5e's 16 MiB scoped default
    cap = budget // (4 * max(cpg, 1) * itemsize)
    cap = max(128, (cap // 128) * 128)
    thw = min(HW, cap)
    thw = max(128, (thw // 128) * 128)
    while HW % thw != 0:      # terminates: 128 divides HW on this path
        thw -= 128
    return thw


# --------------------------- wrapper ----------------------------------------
@functools.partial(jax.jit, static_argnames=("groups",))
def channel_shuffle(x, groups):
    """ChannelShuffle forward. x: (N, C, H, W) -> (N, C, H, W)."""
    N, C, H, W = x.shape
    assert C % groups == 0, "C must be divisible by groups"
    cpg = C // groups
    HW = H * W
    itemsize = jnp.dtype(x.dtype).itemsize
    bytes_accessed = 2 * N * C * HW * itemsize

    if groups == 1 or cpg == 1 and groups == C and C == 1:
        return x
    if groups == 1:
        return x  # identity permutation

    if HW % 128 == 0:
        # ---- primary path: shuffle via DMA block placement ----------------
        THW = _pick_thw(HW, cpg, itemsize)
        n_hw = HW // THW
        x4 = x.reshape(N, groups, cpg, HW)   # contiguous view: free

        out3 = pl.pallas_call(
            _copy_kernel,
            out_shape=jax.ShapeDtypeStruct((N, cpg, groups * HW), x.dtype),
            grid_spec=pltpu.PrefetchScalarGridSpec(
                num_scalar_prefetch=0,
                grid=(N, groups, n_hw),
                in_specs=[pl.BlockSpec((1, 1, cpg, THW),
                                       lambda b, g, h: (b, g, 0, h))],
                out_specs=pl.BlockSpec((1, cpg, THW),
                                       lambda b, g, h: (b, 0, g * n_hw + h)),
            ),
            compiler_params=pltpu.CompilerParams(
                dimension_semantics=("parallel", "parallel", "parallel")),
            cost_estimate=pl.CostEstimate(
                flops=0, transcendentals=0, bytes_accessed=bytes_accessed),
        )(x4)
        # (N, cpg, groups*HW) is row-major identical to (N, cpg, groups, H, W)
        # -> (N, C, H, W) with out-channel = i*groups + j, matching PyTorch.
        return out3.reshape(N, C, H, W)

    # ---- fallback path: lane-unaligned HW, permute in-VMEM ----------------
    # Block spans the full channel dim, so the static permutation is valid.
    x3 = x.reshape(N, C, HW)
    out = pl.pallas_call(
        _make_permute_kernel(C, groups),
        out_shape=jax.ShapeDtypeStruct((N, C, HW), x.dtype),
        grid_spec=pltpu.PrefetchScalarGridSpec(
            num_scalar_prefetch=0,
            grid=(N,),
            in_specs=[pl.BlockSpec((1, C, HW), lambda b: (b, 0, 0))],
            out_specs=pl.BlockSpec((1, C, HW), lambda b: (b, 0, 0)),
        ),
        compiler_params=pltpu.CompilerParams(
            dimension_semantics=("parallel",)),
        cost_estimate=pl.CostEstimate(
            flops=0, transcendentals=0, bytes_accessed=bytes_accessed),
    )(x3)
    return out.reshape(N, C, H, W)


# --------------------------- pure-JAX reference ------------------------------
def channel_shuffle_ref(x, groups):
    N, C, H, W = x.shape
    y = x.reshape(N, groups, C // groups, H, W)
    y = jnp.transpose(y, (0, 2, 1, 3, 4))
    return y.reshape(N, C, H, W)


if __name__ == "__main__":
    N, C, H, W = 2, 4, 16, 16
    groups = 2

    key = jax.random.PRNGKey(0)
    x = jax.random.normal(key, (N, C, H, W), dtype=jnp.float32)

    out = jax.block_until_ready(channel_shuffle(x, groups))

    ref = channel_shuffle_ref(x, groups)
    assert out.shape == (N, C, H, W)
    assert jnp.array_equal(out, ref), "mismatch vs reference"

    print("KERNEL_OK")
</pallas_src>

<mosaic_0001>
module attributes {stable_mosaic.version = 11 : i64} {
  func.func @_copy_kernel(%arg0: i32, %arg1: i32, %arg2: i32, %arg3: memref<1x1x2x256xf32, #tpu.memory_space<vmem>>, %arg4: memref<1x2x256xf32, #tpu.memory_space<vmem>>) attributes {dimension_semantics = [#tpu.dimension_semantics<parallel>, #tpu.dimension_semantics<parallel>, #tpu.dimension_semantics<parallel>], iteration_bounds = array<i64: 2, 2, 1>, scalar_prefetch = 0 : i64, scratch_operands = 0 : i64, tpu.core_type = #tpu.core_type<tc>, window_params = [{transform_indices = @transform_0, window_bounds = array<i64: 1, 1, 2, 256>}, {transform_indices = @transform_1, window_bounds = array<i64: 1, 2, 256>}]} {
    %c0 = arith.constant 0 : index
    %c0_0 = arith.constant 0 : index
    %c0_1 = arith.constant 0 : index
    %c0_2 = arith.constant 0 : index
    %0 = vector.load %arg3[%c0, %c0_0, %c0_1, %c0_2] : memref<1x1x2x256xf32, #tpu.memory_space<vmem>>, vector<1x1x2x256xf32>
    %1 = vector.shape_cast %0 : vector<1x1x2x256xf32> to vector<1x2x256xf32>
    %c0_3 = arith.constant 0 : index
    %c0_4 = arith.constant 0 : index
    %c0_5 = arith.constant 0 : index
    %2 = vector.load %arg4[%c0_3, %c0_4, %c0_5] : memref<1x2x256xf32, #tpu.memory_space<vmem>>, vector<1x2x256xf32>
    tpu.vector_store %arg4[%c0_3, %c0_4, %c0_5], %1 {strides = array<i32>} : memref<1x2x256xf32, #tpu.memory_space<vmem>>, vector<1x2x256xf32>,
    return
  }
  func.func @transform_0(%arg0: i32, %arg1: i32, %arg2: i32) -> (i32, i32, i32, i32) {
    %c0_i32 = arith.constant 0 : i32
    %c0_i32_0 = arith.constant 0 : i32
    return %arg0, %arg1, %c0_i32, %arg2 : i32, i32, i32, i32
  }
  func.func @transform_1(%arg0: i32, %arg1: i32, %arg2: i32) -> (i32, i32, i32) {
    %c1_i32 = arith.constant 1 : i32
    %0 = arith.muli %arg1, %c1_i32 : i32
    %1 = arith.addi %0, %arg2 : i32
    %c0_i32 = arith.constant 0 : i32
    %c0_i32_0 = arith.constant 0 : i32
    return %arg0, %c0_i32, %1 : i32, i32, i32
  }
}

</mosaic_0001>

<llo_original>
// kernel: channel_shuffle.1
$region0: #{channel_shuffle.1}
  #allocation0 [shape = 'u32[]', space=smem, size = 0x4, offset = 0x4, fixed_abs, tag = 'smem constant byte address 0x4 - core index']
  #allocation1 [shape = 'u32[144,128]{1,0:T(1,128)}', space=vmem, size = 0x12000, scoped, tag = 'internal scratch']
  %s0 = inlined_call_operand.vmem [shape: f32[2,2,2,256], index: 0, kind: input, shape index: {}]
  %s1 = inlined_call_operand.vmem [shape: f32[2,2,512], index: 1, kind: output, shape index: {}]
  %s2 = sld [smem:[#allocation0]]
  $region37: #{channel_shuffle.1} parent=0
    _
  %s4 = ssub.s32 1, %s2
  %s5 = scalar_select 0, %s4, %s2
  loop: start=0, step=1, limit=6
  $region2: #{channel_shuffle.1} parent=0 // loop_pre_header
    _
  $region3: #{channel_shuffle.1} parent=0 // loop_header
    %s7 = sphi 0, %s11
    %p8 = scmp.ge.s32.totalorder %s7, 6
    %s14 = sphi 0, %s33
    %s15 = sphi 0, %s29
    %s16 = sphi 0, %s25
    %s17 = sphi 0, %s14
    %s18 = sphi 0, %s15
    %s19 = sphi 0, %s16
    %s20 = sphi 0, %s17
    %s21 = sphi 0, %s18
    %s22 = sphi 0, %s19
    %s40 = sphi 0, %s42
    %s43 = sphi 0, %s40
    %s44 = sphi 0, %s43
    %s60 = sphi 0, %s44
    %s70 = sphi 0, %s72
    %s73 = sphi 0, %s70
    %s74 = sphi 0, %s73
    %s90 = sphi 0, %s74
  $region4: #{channel_shuffle.1} parent=0 // loop_header_branch
    %10 = sbr.rel (%p8) target = $region8
  $region5: #{channel_shuffle.1} parent=0 // loop_body
    %s12 = ssub.s32 %s7, 1
    %s13 = ssub.s32 %s7, 2
    %s23 = sadd.s32 1, %s16
    %p24 = scmp.ge.s32.totalorder %s23, 1
    %s25 = scalar_select %p24, 0, %s23
    %s26 = sadd.s32 1, %s15
    %s27 = scalar_select %p24, %s26, %s15
    %p28 = scmp.ge.s32.totalorder %s27, 2
    %s29 = scalar_select %p28, 0, %s27
    %s30 = sadd.s32 1, %s14
    %s31 = scalar_select %p28, %s30, %s14
    %p32 = scmp.ge.s32.totalorder %s31, 2
    %s33 = scalar_select %p32, 0, %s31
    %s34 = ssub.s32 %s14, %s33
    %s35 = ssub.s32 %s15, %s29
    %s36 = sor.u32 %s34, %s35
    %s37 = ssub.s32 %s16, %s25
    %s38 = sor.u32 %s36, %s37
    %p39 = scmp.eq.s32.totalorder %s38, 0
    %s41 = sadd.s32 %s40, 1
    %s42 = scalar_select %p39, %s40, %s41
    %p45 = pneg %p39
    %p46 = scmp.eq.s32.totalorder %s7, 3
    %p47 = por %p45, %p46
    %p48 = scmp.ne.s32.totalorder %s40, %s43
    %p49 = scmp.eq.s32.totalorder %s7, 0
    %p50 = por %p48, %p49
    %p51 = scmp.ne.s32.totalorder %s40, %s43
    %p52 = scmp.eq.s32.totalorder %s12, 3
    %p53 = por %p51, %p52
    %p54 = scmp.ne.s32.totalorder %s43, %s44
    %p55 = scmp.eq.s32.totalorder %s12, 0
    %p56 = por %p54, %p55
    %p57 = scmp.ne.s32.totalorder %s43, %s44
    %p58 = scmp.eq.s32.totalorder %s13, 3
    %p59 = por %p57, %p58
    %p61 = scmp.ne.s32.totalorder %s44, %s60
    %p62 = scmp.eq.s32.totalorder %s13, 0
    %p63 = por %p61, %p62
    %s64 = sadd.s32 %s15, %s16
    %s65 = sadd.s32 %s29, %s25
    %s66 = ssub.s32 %s14, %s33
    %s67 = ssub.s32 %s64, %s65
    %s68 = sor.u32 %s66, %s67
    %p69 = scmp.eq.s32.totalorder %s68, 0
    %s71 = sadd.s32 %s70, 1
    %s72 = scalar_select %p69, %s70, %s71
    %p75 = pneg %p69
    %p76 = scmp.eq.s32.totalorder %s7, 3
    %p77 = por %p75, %p76
    %p78 = scmp.ne.s32.totalorder %s70, %s73
    %p79 = scmp.eq.s32.totalorder %s7, 0
    %p80 = por %p78, %p79
    %p81 = scmp.ne.s32.totalorder %s70, %s73
    %p82 = scmp.eq.s32.totalorder %s12, 3
    %p83 = por %p81, %p82
    %p84 = scmp.ne.s32.totalorder %s73, %s74
    %p85 = scmp.eq.s32.totalorder %s12, 0
    %p86 = por %p84, %p85
    %p87 = scmp.ne.s32.totalorder %s73, %s74
    %p88 = scmp.eq.s32.totalorder %s13, 3
    %p89 = por %p87, %p88
    %p91 = scmp.ne.s32.totalorder %s74, %s90
    %p92 = scmp.eq.s32.totalorder %s13, 0
    %p93 = por %p91, %p92
    %p94 = scmp.le.s32.totalorder 1, %s7
    %p95 = scmp.lt.s32.totalorder %s7, 5
    %p96 = pnand %p94, %p95
    %p97 = pneg %p96
    // Predicated region
    $region9: #{channel_shuffle.1} parent=5 // pred_check
      _
    $region10: #{channel_shuffle.1} parent=5 // pred_check_branch
      %99 = sbr.rel (%p96) target = $region12
    $region11: #{channel_shuffle.1} parent=5 // pred_region
      %s100 = ssub.s32 %s7, 1
    $region12: #{channel_shuffle.1} parent=5 // pred_fallthru
      _
    %p101 = scmp.lt.s32.totalorder %s7, 4
    // Predicated region
    $region13: #{channel_shuffle.1} parent=5 // pred_check
      %p102 = pneg %p101
    $region14: #{channel_shuffle.1} parent=5 // pred_check_branch
      %104 = sbr.rel (%p102) target = $region16
    $region15: #{channel_shuffle.1} parent=5 // pred_region
      // Predicated region
      $region17: #{channel_shuffle.1} parent=15 // pred_check
        %p105 = pneg %p50
      $region18: #{channel_shuffle.1} parent=15 // pred_check_branch
        %107 = sbr.rel (%p105) target = $region20
      $region19: #{channel_shuffle.1} parent=15 // pred_region
        %s108 = smul.u32 2, %s16
        %p109 = scmp.lt.s32.totalorder %s14, 1
        %s110 = scalar_select %p109, %s14, 1
        %p111 = scmp.lt.s32.totalorder %s15, 1
        %s112 = scalar_select %p111, %s15, 1
        %p113 = scmp.lt.s32.totalorder %s108, 1
        %s114 = scalar_select %p113, %s108, 1
        %s115 = smul.addr %s112, 2
        %s116 = sadd.s32 %s114, %s115
        %s117 = smul.addr %s110, 4
        %s118 = sadd.s32 %s116, %s117
        %s119 = smul.addr %s118, 2
        %s120 = scalar_lea.vmem %s0, %s119
        %s121 = smul.u32 2, %s16
      $region20: #{channel_shuffle.1} parent=15 // pred_fallthru
        _
    $region16: #{channel_shuffle.1} parent=5 // pred_fallthru
      _
    %p122 = scmp.le.s32.totalorder 1, %s7
    %p123 = scmp.lt.s32.totalorder %s7, 5
    %p124 = pnand %p122, %p123
    %p125 = pneg %p124
    // Predicated region
    $region21: #{channel_shuffle.1} parent=5 // pred_check
      _
    $region22: #{channel_shuffle.1} parent=5 // pred_check_branch
      %127 = sbr.rel (%p124) target = $region24
    $region23: #{channel_shuffle.1} parent=5 // pred_region
      %s128 = ssub.s32 %s7, 1
      %s129 = smul.u32 2, %s19
      %p130 = scmp.lt.s32.totalorder %s17, 1
      %s131 = scalar_select %p130, %s17, 1
      %p132 = scmp.lt.s32.totalorder %s18, 1
      %s133 = scalar_select %p132, %s18, 1
      %p134 = scmp.lt.s32.totalorder %s129, 1
      %s135 = scalar_select %p134, %s129, 1
      %s136 = smul.addr %s133, 2
      %s137 = sadd.s32 %s135, %s136
      %s138 = smul.addr %s131, 4
      %s139 = sadd.s32 %s137, %s138
      %s140 = smul.addr %s139, 2
      %s141 = scalar_lea.vmem %s0, %s140
      %p142 = pneg %p56
      %p143 = pneg %p53
      %p144 = pneg %p86
      %p145 = pneg %p83
      %s146 = sadd.s32 %s18, %s19
      %s147 = smul.u32 2, %s146
      %p148 = scmp.lt.s32.totalorder %s17, 1
      %s149 = scalar_select %p148, %s17, 1
      %p150 = scmp.lt.s32.totalorder %s147, 3
      %s151 = scalar_select %p150, %s147, 3
      %s152 = smul.addr %s149, 4
      %s153 = sadd.s32 %s151, %s152
      %s154 = smul.addr %s153, 2
      %s155 = scalar_lea.vmem %s1, %s154
      %s156 = smul.u32 2, %s19
      %p157 = scmp.lt.s32.totalorder %s17, 1
      %s158 = scalar_select %p157, %s17, 1
      %p159 = scmp.lt.s32.totalorder %s18, 1
      %s160 = scalar_select %p159, %s18, 1
      %p161 = scmp.lt.s32.totalorder %s156, 1
      %s162 = scalar_select %p161, %s156, 1
      %s163 = smul.addr %s160, 2
      %s164 = sadd.s32 %s162, %s163
      %s165 = smul.addr %s158, 4
      %s166 = sadd.s32 %s164, %s165
      %s167 = smul.addr %s166, 2
      %s168 = scalar_lea.vmem %s0, %s167
      %s169 = smul.u32 2, %s19
      %s170 = sadd.s32 %s18, %s19
      %s171 = smul.u32 2, %s170
      %p172 = scmp.lt.s32.totalorder %s17, 1
      %s173 = scalar_select %p172, %s17, 1
      %p174 = scmp.lt.s32.totalorder %s171, 3
      %s175 = scalar_select %p174, %s171, 3
      %s176 = smul.addr %s173, 4
      %s177 = sadd.s32 %s175, %s176
      %s178 = smul.addr %s177, 2
      %s179 = scalar_lea.vmem %s1, %s178
      %s180 = sadd.s32 %s18, %s19
      %s181 = smul.u32 2, %s180
      %v182 = vld [vmem:[%s168] sm:$0xf]
      %183 = vst [vmem:[%s179] sm:$0xf] %v182
      %s184 = sadd.s32 %s18, %s19
      %s185 = smul.u32 2, %s184
      %p186 = scmp.lt.s32.totalorder %s17, 1
      %s187 = scalar_select %p186, %s17, 1
      %p188 = scmp.lt.s32.totalorder %s185, 3
      %s189 = scalar_select %p188, %s185, 3
      %s190 = smul.addr %s187, 4
      %s191 = sadd.s32 %s189, %s190
      %s192 = smul.addr %s191, 2
      %s193 = scalar_lea.vmem %s1, %s192
      // Predicated region
      $region25: #{channel_shuffle.1} parent=23 // pred_check
        %p194 = pneg %p83
      $region26: #{channel_shuffle.1} parent=23 // pred_check_branch
        %196 = sbr.rel (%p194) target = $region28
      $region27: #{channel_shuffle.1} parent=23 // pred_region
        %s197 = sadd.s32 %s18, %s19
        %s198 = smul.u32 2, %s197
      $region28: #{channel_shuffle.1} parent=23 // pred_fallthru
        _
    $region24: #{channel_shuffle.1} parent=5 // pred_fallthru
      _
    %p199 = scmp.le.s32.totalorder 2, %s7
    // Predicated region
    $region29: #{channel_shuffle.1} parent=5 // pred_check
      %p200 = pneg %p199
    $region30: #{channel_shuffle.1} parent=5 // pred_check_branch
      %202 = sbr.rel (%p200) target = $region32
    $region31: #{channel_shuffle.1} parent=5 // pred_region
      %s203 = ssub.s32 %s7, 2
      // Predicated region
      $region33: #{channel_shuffle.1} parent=31 // pred_check
        %p204 = pneg %p89
      $region34: #{channel_shuffle.1} parent=31 // pred_check_branch
        %206 = sbr.rel (%p204) target = $region36
      $region35: #{channel_shuffle.1} parent=31 // pred_region
        %s207 = sadd.s32 %s21, %s22
        %s208 = smul.u32 2, %s207
        %p209 = scmp.lt.s32.totalorder %s20, 1
        %s210 = scalar_select %p209, %s20, 1
        %p211 = scmp.lt.s32.totalorder %s208, 3
        %s212 = scalar_select %p211, %s208, 3
        %s213 = smul.addr %s210, 4
        %s214 = sadd.s32 %s212, %s213
        %s215 = smul.addr %s214, 2
        %s216 = scalar_lea.vmem %s1, %s215
      $region36: #{channel_shuffle.1} parent=31 // pred_fallthru
        _
    $region32: #{channel_shuffle.1} parent=5 // pred_fallthru
      _
  $region6: #{channel_shuffle.1} parent=0 // loop_footer
    %s11 = sadd.s32 1, %s7
  $region7: #{channel_shuffle.1} parent=0 // loop_footer_branch
    %6 = sbr.rel target = $region3
  $region8: #{channel_shuffle.1} parent=0 // loop_exit
    _

</llo_original>
